<compile_context>
chip_gen: v6e
topology: v6e:2x2x1
jax: 0.10.0
libtpu: 0.0.40
codegen_flags: <defaults>
</compile_context>

<pallas_src>
import functools

import jax
import jax.numpy as jnp
from jax import lax
from jax.experimental import pallas as pl
from jax.experimental.pallas import tpu as pltpu

_LANES = 128


def _device_kind():
    try:
        return jax.devices()[0].device_kind.lower()
    except Exception:  # pragma: no cover - defensive
        return ""


def _rmse_partial_kernel(y_ref, yhat_ref, o_ref, acc_ref, *, total_rows,
                         block_rows):
    """Accumulates sum((y - y_hat)^2) over one shard's row-blocks."""
    step = pl.program_id(1)
    n_steps = pl.num_programs(1)
    logical_block = pl.program_id(0) * n_steps + step
    block_start = logical_block * block_rows
    fold = block_rows // 8  # block_rows is always a multiple of 8

    @pl.when(step == 0)
    def _():
        acc_ref[...] = jnp.zeros_like(acc_ref)

    # Upcast inside the kernel: inputs stay in their native dtype in HBM
    # (halves HBM traffic for 16-bit inputs); accumulate in f32.
    d = y_ref[...].astype(jnp.float32) - yhat_ref[...].astype(jnp.float32)
    sq = d * d

    is_full = block_start + block_rows <= total_rows

    @pl.when(is_full)
    def _():
        # Tile-aligned (8,128)-preserving reshape + tree fold into a single
        # vreg-sized accumulator: pure VPU adds, no acc load/store per vreg.
        acc_ref[...] += sq.reshape(fold, 8, _LANES).sum(axis=0)

    @pl.when(jnp.logical_not(is_full))
    def _():
        # Edge block (or a clamped duplicate block of a shard that ran out of
        # real work): zero the rows that fall outside the real array.
        # NOTE: jnp.where is a true select - out-of-range rows may hold
        # garbage (Inf/NaN after d*d) and must be discarded, not multiplied.
        row_ids = block_start + lax.broadcasted_iota(jnp.int32, sq.shape, 0)
        masked = jnp.where(row_ids < total_rows, sq, 0.0)
        acc_ref[...] += masked.reshape(fold, 8, _LANES).sum(axis=0)

    @pl.when(step == n_steps - 1)
    def _():
        # One small (4 KiB) cross-lane reduce per shard, splatted into a
        # lane-dense tile so the output store is unmasked.
        o_ref[...] = jnp.zeros((8, _LANES), jnp.float32) + jnp.sum(acc_ref[...])


def rmse_pallas(y, y_hat, eps=1e-7):
    """Returns sqrt(mean((y - y_hat)^2) + eps) as a float32 scalar."""
    assert y.shape == y_hat.shape, "RMSE expects equal shapes"
    n = y.size
    eps = jnp.float32(eps)
    if n == 0:  # guard against divide-by-zero (torch would give NaN here)
        return jnp.sqrt(eps)

    y_f = y.reshape(-1)
    yh_f = y_hat.reshape(-1)

    # Sublane granularity required by dtype packing (f32: 8, bf16: 16, i8: 32).
    sub_mult = max(8, 32 // jnp.dtype(y.dtype).itemsize,
                   32 // jnp.dtype(y_hat.dtype).itemsize)
    rows_total = n // _LANES

    if rows_total < sub_mult:
        # Tiny input: pallas_call launch overhead dominates; plain JAX wins.
        d = y_f.astype(jnp.float32) - yh_f.astype(jnp.float32)
        return jnp.sqrt(jnp.sum(d * d) / jnp.float32(n) + eps)

    # Ragged (< 128 element) tail handled in plain JAX and folded into the sum
    # -- avoids any jnp.pad HBM round trip of the full inputs.
    n_main = rows_total * _LANES
    tail_sq = jnp.float32(0.0)
    if n_main < n:
        dt = y_f[n_main:].astype(jnp.float32) - yh_f[n_main:].astype(jnp.float32)
        tail_sq = jnp.sum(dt * dt)
        y_main, yh_main = y_f[:n_main], yh_f[:n_main]  # only in unaligned case
    else:
        y_main, yh_main = y_f, yh_f                    # no copies at all

    y2 = y_main.reshape(rows_total, _LANES)   # contiguous reshape: free
    yh2 = yh_main.reshape(rows_total, _LANES)

    # ---- Per-generation tuning -------------------------------------------
    kind = _device_kind()
    is_v7 = "v7" in kind
    is_v5e = ("v5 lite" in kind) or ("v5e" in kind)
    is_v5p = ("v5" in kind) and not is_v5e
    multi_tc = is_v7 or ("v4" in kind) or is_v5p   # 2 TensorCores per device
    # v7x has only 64 MiB physical VMEM per TC; v5e/v6e have 128 MiB.
    vmem_limit = (48 if is_v7 else 96) * 1024 * 1024

    # Size blocks by bytes (native dtype), not rows: ~4 MiB per input per
    # pipeline buffer on v7x, ~8 MiB on v5e/v6e.  Double-buffered 2-input
    # footprint stays well under the per-generation VMEM budget above.
    target_bytes = (4 if is_v7 else 8) * 1024 * 1024
    itemsize = max(jnp.dtype(y.dtype).itemsize, jnp.dtype(y_hat.dtype).itemsize)
    target_rows = max(sub_mult,
                      (target_bytes // (_LANES * itemsize)) // sub_mult * sub_mult)
    block_rows = int(min(target_rows, (rows_total // sub_mult) * sub_mult))

    nblocks = -(-rows_total // block_rows)
    num_shards = 2 if (multi_tc and nblocks >= 2) else 1
    steps = -(-nblocks // num_shards)

    def in_map(s, i):
        # Clamp so a shard's trailing (fully out-of-range) step just re-reads
        # the last real block; its contribution is masked to zero in-kernel.
        return (jnp.minimum(s * steps + i, nblocks - 1), 0)

    kernel = functools.partial(_rmse_partial_kernel,
                               total_rows=rows_total, block_rows=block_rows)

    partials = pl.pallas_call(
        kernel,
        out_shape=jax.ShapeDtypeStruct((num_shards * 8, _LANES), jnp.float32),
        grid_spec=pltpu.PrefetchScalarGridSpec(
            num_scalar_prefetch=0,
            grid=(num_shards, steps),
            in_specs=[
                pl.BlockSpec((block_rows, _LANES), in_map),
                pl.BlockSpec((block_rows, _LANES), in_map),
            ],
            out_specs=pl.BlockSpec((8, _LANES), lambda s, i: (s, 0)),
            # Single vreg-tile accumulator (4 KiB) instead of a full block.
            scratch_shapes=[pltpu.VMEM((8, _LANES), jnp.float32)],
        ),
        compiler_params=pltpu.CompilerParams(
            dimension_semantics=("parallel", "arbitrary"),
            vmem_limit_bytes=vmem_limit,
        ),
        # Advisory: lets XLA schedule around a known HBM-bound custom call.
        cost_estimate=pl.CostEstimate(
            flops=3 * n_main,
            transcendentals=0,
            bytes_accessed=int(y2.nbytes) + int(yh2.nbytes),
        ),
    )(y2, yh2)

    sq_sum = jnp.sum(partials[::8, 0]) + tail_sq
    return jnp.sqrt(sq_sum / jnp.float32(n) + eps)


if __name__ == "__main__":
    key = jax.random.PRNGKey(0)
    k1, k2 = jax.random.split(key)
    # Small NCHW-like shapes consistent with a typical regression output.
    shape = (2, 4, 16, 16)
    y = jax.random.normal(k1, shape, dtype=jnp.float32)
    y_hat = jax.random.normal(k2, shape, dtype=jnp.float32)

    result = jax.block_until_ready(rmse_pallas(y, y_hat))

    # Cross-check against plain-JAX reference.
    ref = jnp.sqrt(jnp.mean((y - y_hat) ** 2) + 1e-7)
    assert jnp.allclose(result, ref, rtol=1e-5, atol=1e-6), (result, ref)

    print("KERNEL_OK")
</pallas_src>

<mosaic_0001>
module attributes {stable_mosaic.version = 11 : i64} {
  func.func @_rmse_partial_kernel(%arg0: i32, %arg1: i32, %arg2: memref<16x128xf32, #tpu.memory_space<vmem>>, %arg3: memref<16x128xf32, #tpu.memory_space<vmem>>, %arg4: memref<8x128xf32, #tpu.memory_space<vmem>>, %arg5: memref<8x128xf32, #tpu.memory_space<vmem>>) attributes {dimension_semantics = [#tpu.dimension_semantics<parallel>, #tpu.dimension_semantics<arbitrary>], iteration_bounds = array<i64: 1, 1>, scalar_prefetch = 0 : i64, scratch_operands = 1 : i64, tpu.core_type = #tpu.core_type<tc>, window_params = [{transform_indices = @transform_0, window_bounds = array<i64: 16, 128>}, {transform_indices = @transform_1, window_bounds = array<i64: 16, 128>}, {transform_indices = @transform_2, window_bounds = array<i64: 8, 128>}]} {
    %c1_i32 = arith.constant 1 : i32
    %0 = arith.muli %arg0, %c1_i32 : i32
    %1 = arith.addi %0, %arg1 : i32
    %c16_i32 = arith.constant 16 : i32
    %2 = arith.muli %1, %c16_i32 : i32
    %c0_i32 = arith.constant 0 : i32
    %3 = arith.cmpi eq, %arg1, %c0_i32 : i32
    %4 = arith.extui %3 : i1 to i32
    %c0_i32_0 = arith.constant 0 : i32
    %5 = arith.cmpi ne, %4, %c0_i32_0 : i32
    scf.if %5 {
      %cst = arith.constant 0.000000e+00 : f32
      %20 = vector.broadcast %cst : f32 to vector<8x128xf32>
      %c0_10 = arith.constant 0 : index
      %c0_11 = arith.constant 0 : index
      %21 = vector.load %arg5[%c0_10, %c0_11] : memref<8x128xf32, #tpu.memory_space<vmem>>, vector<8x128xf32>
      tpu.vector_store %arg5[%c0_10, %c0_11], %20 {strides = array<i32>} : memref<8x128xf32, #tpu.memory_space<vmem>>, vector<8x128xf32>,
    } else {
    }
    %c0 = arith.constant 0 : index
    %c0_1 = arith.constant 0 : index
    %6 = vector.load %arg2[%c0, %c0_1] : memref<16x128xf32, #tpu.memory_space<vmem>>, vector<16x128xf32>
    %c0_2 = arith.constant 0 : index
    %c0_3 = arith.constant 0 : index
    %7 = vector.load %arg3[%c0_2, %c0_3] : memref<16x128xf32, #tpu.memory_space<vmem>>, vector<16x128xf32>
    %8 = arith.subf %6, %7 : vector<16x128xf32>
    %9 = arith.mulf %8, %8 : vector<16x128xf32>
    %c16_i32_4 = arith.constant 16 : i32
    %10 = arith.addi %2, %c16_i32_4 : i32
    %c16_i32_5 = arith.constant 16 : i32
    %11 = arith.cmpi sle, %10, %c16_i32_5 : i32
    %12 = arith.extui %11 : i1 to i32
    %c0_i32_6 = arith.constant 0 : i32
    %13 = arith.cmpi ne, %12, %c0_i32_6 : i32
    scf.if %13 {
      %c0_10 = arith.constant 0 : index
      %c0_11 = arith.constant 0 : index
      %20 = vector.load %arg5[%c0_10, %c0_11] : memref<8x128xf32, #tpu.memory_space<vmem>>, vector<8x128xf32>
      %21 = vector.shape_cast %9 : vector<16x128xf32> to vector<2x8x128xf32>
      %cst = arith.constant dense<0.000000e+00> : vector<8x128xf32>
      %22 = vector.multi_reduction <add>, %21, %cst [0] : vector<2x8x128xf32> to vector<8x128xf32>
      %23 = arith.addf %20, %22 : vector<8x128xf32>
      %c0_12 = arith.constant 0 : index
      %c0_13 = arith.constant 0 : index
      %24 = vector.load %arg5[%c0_12, %c0_13] : memref<8x128xf32, #tpu.memory_space<vmem>>, vector<8x128xf32>
      tpu.vector_store %arg5[%c0_12, %c0_13], %23 {strides = array<i32>} : memref<8x128xf32, #tpu.memory_space<vmem>>, vector<8x128xf32>,
    } else {
    }
    %true = arith.constant true
    %14 = arith.xori %11, %true : i1
    %15 = arith.extui %14 : i1 to i32
    %c0_i32_7 = arith.constant 0 : i32
    %16 = arith.cmpi ne, %15, %c0_i32_7 : i32
    scf.if %16 {
      %20 = tpu.iota {dimensions = array<i32: 0>} : vector<16x128xi32>
      %21 = vector.broadcast %2 : i32 to vector<16x128xi32>
      %22 = arith.addi %21, %20 : vector<16x128xi32>
      %c16_i32_10 = arith.constant 16 : i32
      %23 = vector.broadcast %c16_i32_10 : i32 to vector<16x128xi32>
      %24 = arith.cmpi slt, %22, %23 : vector<16x128xi32>
      %cst = arith.constant 0.000000e+00 : f32
      %25 = vector.broadcast %cst : f32 to vector<16x128xf32>
      %26 = arith.select %24, %9, %25 : vector<16x128xi1>, vector<16x128xf32>
      %c0_11 = arith.constant 0 : index
      %c0_12 = arith.constant 0 : index
      %27 = vector.load %arg5[%c0_11, %c0_12] : memref<8x128xf32, #tpu.memory_space<vmem>>, vector<8x128xf32>
      %28 = vector.shape_cast %26 : vector<16x128xf32> to vector<2x8x128xf32>
      %cst_13 = arith.constant dense<0.000000e+00> : vector<8x128xf32>
      %29 = vector.multi_reduction <add>, %28, %cst_13 [0] : vector<2x8x128xf32> to vector<8x128xf32>
      %30 = arith.addf %27, %29 : vector<8x128xf32>
      %c0_14 = arith.constant 0 : index
      %c0_15 = arith.constant 0 : index
      %31 = vector.load %arg5[%c0_14, %c0_15] : memref<8x128xf32, #tpu.memory_space<vmem>>, vector<8x128xf32>
      tpu.vector_store %arg5[%c0_14, %c0_15], %30 {strides = array<i32>} : memref<8x128xf32, #tpu.memory_space<vmem>>, vector<8x128xf32>,
    } else {
    }
    %c0_i32_8 = arith.constant 0 : i32
    %17 = arith.cmpi eq, %arg1, %c0_i32_8 : i32
    %18 = arith.extui %17 : i1 to i32
    %c0_i32_9 = arith.constant 0 : i32
    %19 = arith.cmpi ne, %18, %c0_i32_9 : i32
    scf.if %19 {
      %cst = arith.constant 0.000000e+00 : f32
      %20 = vector.broadcast %cst : f32 to vector<8x128xf32>
      %c0_10 = arith.constant 0 : index
      %c0_11 = arith.constant 0 : index
      %21 = vector.load %arg5[%c0_10, %c0_11] : memref<8x128xf32, #tpu.memory_space<vmem>>, vector<8x128xf32>
      %22 = vector.shape_cast %21 : vector<8x128xf32> to vector<1x8x128xf32>
      %cst_12 = arith.constant dense<0.000000e+00> : vector<1xf32>
      %23 = vector.multi_reduction <add>, %22, %cst_12 [1, 2] : vector<1x8x128xf32> to vector<1xf32>
      %24 = vector.shape_cast %23 : vector<1xf32> to vector<1x1x1xf32>
      %25 = vector.extract %24[0, 0, 0] : f32 from vector<1x1x1xf32>
      %26 = vector.broadcast %25 : f32 to vector<8x128xf32>
      %27 = arith.addf %20, %26 : vector<8x128xf32>
      %c0_13 = arith.constant 0 : index
      %c0_14 = arith.constant 0 : index
      %28 = vector.load %arg4[%c0_13, %c0_14] : memref<8x128xf32, #tpu.memory_space<vmem>>, vector<8x128xf32>
      tpu.vector_store %arg4[%c0_13, %c0_14], %27 {strides = array<i32>} : memref<8x128xf32, #tpu.memory_space<vmem>>, vector<8x128xf32>,
    } else {
    }
    return
  }
  func.func @transform_0(%arg0: i32, %arg1: i32) -> (i32, i32) {
    %c1_i32 = arith.constant 1 : i32
    %0 = arith.muli %arg0, %c1_i32 : i32
    %1 = arith.addi %0, %arg1 : i32
    %c0_i32 = arith.constant 0 : i32
    %2 = arith.minsi %1, %c0_i32 : i32
    %c0_i32_0 = arith.constant 0 : i32
    %c0_i32_1 = arith.constant 0 : i32
    return %2, %c0_i32_0 : i32, i32
  }
  func.func @transform_1(%arg0: i32, %arg1: i32) -> (i32, i32) {
    %c1_i32 = arith.constant 1 : i32
    %0 = arith.muli %arg0, %c1_i32 : i32
    %1 = arith.addi %0, %arg1 : i32
    %c0_i32 = arith.constant 0 : i32
    %2 = arith.minsi %1, %c0_i32 : i32
    %c0_i32_0 = arith.constant 0 : i32
    %c0_i32_1 = arith.constant 0 : i32
    return %2, %c0_i32_0 : i32, i32
  }
  func.func @transform_2(%arg0: i32, %arg1: i32) -> (i32, i32) {
    %c0_i32 = arith.constant 0 : i32
    %c0_i32_0 = arith.constant 0 : i32
    return %arg0, %c0_i32 : i32, i32
  }
}

</mosaic_0001>

<llo_original>
// kernel: tpu_custom_call.1
$region0: #{tpu_custom_call.1}
  #allocation0 [shape = 'u32[]', space=smem, size = 0x4, offset = 0x4, fixed_abs, tag = 'smem constant byte address 0x4 - core index']
  #allocation1 [shape = 'u32[144,128]{1,0:T(1,128)}', space=vmem, size = 0x12000, scoped, tag = 'internal scratch']
  #allocation2 [shape = 'f32[8,128]{1,0:T(8,128)}', space=vmem, size = 0x1000, scoped, tag = 'scratch operand']
  %s0 = inlined_call_operand.hbm [shape: f32[16,128], index: 0, kind: input, shape index: {}]
  %s1 = inlined_call_operand.hbm [shape: f32[16,128], index: 1, kind: input, shape index: {}]
  %s2 = inlined_call_operand.hbm [shape: f32[8,128], index: 2, kind: output, shape index: {}]
  %s3 = sld [smem:[#allocation0]]
  $region42: #{tpu_custom_call.1} parent=0
    _
  %s5 = ssub.s32 1, %s3
  %s6 = scalar_select 0, %s5, %s3
  $region1: #{tpu_custom_call.1} parent=0
    #allocation3 [shape = 'u8[8192]{0}', space=vmem, size = 0x2000, scoped, tag = 'input window, operand 0, single buffered']
    #allocation4 [shape = 's32[1]{0}', space=sflag, size = 0x4, scoped, tag = 'scoped memory for tpu_custom_call.1']
    #allocation5 [shape = 's32[1]{0}', space=sflag, size = 0x4, scoped, tag = 'scoped memory for tpu_custom_call.1']
    #allocation6 [shape = 'u8[8192]{0}', space=vmem, size = 0x2000, scoped, tag = 'input window, operand 1, single buffered']
    #allocation7 [shape = 's32[1]{0}', space=sflag, size = 0x4, scoped, tag = 'scoped memory for tpu_custom_call.1']
    #allocation8 [shape = 'u8[4096]{0}', space=vmem, size = 0x1000, scoped, tag = 'output window, operand 0, single buffered']
    %7 = vsyncpa [#allocation4], 0
    %8 = vsyncpa [#allocation7], 0
    %9 = vsyncpa [#allocation5], 0
    // Predicated region
    $region2: #{tpu_custom_call.1} parent=1 // pred_check
      _
    $region3: #{tpu_custom_call.1} parent=1 // pred_check_branch
      %11 = sbr.rel (0) target = $region5
    $region4: #{tpu_custom_call.1} parent=1 // pred_region
      %s12 = sadd.s32 0, 0
      %p13 = scmp.lt.s32.totalorder %s12, 0
      %s14 = scalar_select %p13, %s12, 0
      %s15 = smul.u32 2, %s14
      %s17 = ssub.s32 256, 256
      %18 = vsyncadd [#allocation4], %s17
      %s19 = smul.addr %s15, 128
      %s20 = scalar_lea.hbm %s0, %s19
      %s21 = sshll.u32 [#allocation3], 4
      %s22 = int_to_ptr.vmem [resolvable:$true] %s21
      %27 = dma.hbm_to_vmem [thread:$0]  %s20, 256, %s22, [#allocation4], 128, 128, 8
    $region5: #{tpu_custom_call.1} parent=1 // pred_fallthru
      _
    // Predicated region
    $region6: #{tpu_custom_call.1} parent=1 // pred_check
      _
    $region7: #{tpu_custom_call.1} parent=1 // pred_check_branch
      %29 = sbr.rel (0) target = $region9
    $region8: #{tpu_custom_call.1} parent=1 // pred_region
      %s30 = sadd.s32 0, 0
      %p31 = scmp.lt.s32.totalorder %s30, 0
      %s32 = scalar_select %p31, %s30, 0
      %s33 = smul.u32 2, %s32
      %s35 = ssub.s32 256, 256
      %36 = vsyncadd [#allocation7], %s35
      %s37 = smul.addr %s33, 128
      %s38 = scalar_lea.hbm %s1, %s37
      %s39 = sshll.u32 [#allocation6], 4
      %s40 = int_to_ptr.vmem [resolvable:$true] %s39
      %45 = dma.hbm_to_vmem [thread:$0]  %s38, 256, %s40, [#allocation7], 128, 128, 8
    $region9: #{tpu_custom_call.1} parent=1 // pred_fallthru
      _
    // Predicated region
    $region10: #{tpu_custom_call.1} parent=1 // pred_check
      _
    $region11: #{tpu_custom_call.1} parent=1 // pred_check_branch
      %47 = sbr.rel (0) target = $region13
    $region12: #{tpu_custom_call.1} parent=1 // pred_region
      %48 = dma.done [#allocation4], 256
    $region13: #{tpu_custom_call.1} parent=1 // pred_fallthru
      _
    // Predicated region
    $region14: #{tpu_custom_call.1} parent=1 // pred_check
      _
    $region15: #{tpu_custom_call.1} parent=1 // pred_check_branch
      %50 = sbr.rel (0) target = $region17
    $region16: #{tpu_custom_call.1} parent=1 // pred_region
      %51 = dma.done [#allocation7], 256
    $region17: #{tpu_custom_call.1} parent=1 // pred_fallthru
      _
    %s52 = sadd.s32 0, 0
    %p53 = scmp.lt.s32.totalorder %s52, 0
    %s54 = scalar_select %p53, %s52, 0
    %s55 = smul.u32 2, %s54
    %s56 = sadd.s32 0, 0
    %p57 = scmp.lt.s32.totalorder %s56, 0
    %s58 = scalar_select %p57, %s56, 0
    %s59 = smul.u32 2, %s58
    %s60 = sadd.s32 0, 0
    %s61 = smul.u32 %s60, 16
    %p62 = scmp.eq.s32.totalorder 0, 0
    // Predicated region
    $region18: #{tpu_custom_call.1} parent=1 // pred_check
      %p63 = pneg %p62
    $region19: #{tpu_custom_call.1} parent=1 // pred_check_branch
      %65 = sbr.rel (%p63) target = $region21
    $region20: #{tpu_custom_call.1} parent=1 // pred_region
      %66 = vst [vmem:[#allocation2] sm:$0xff] 0.0
    $region21: #{tpu_custom_call.1} parent=1 // pred_fallthru
      _
    %v67 = vld [vmem:[#allocation3] sm:$0xff]
    %v68 = vld [vmem:[#allocation3 + $0x8] sm:$0xff]
    %v69 = vld [vmem:[#allocation6] sm:$0xff]
    %v70 = vld [vmem:[#allocation6 + $0x8] sm:$0xff]
    %v71 = vsub.f32 %v67, %v69
    %v72 = vsub.f32 %v68, %v70
    %v73 = vmul.f32 %v71, %v71
    %v74 = vmul.f32 %v72, %v72
    %s75 = sadd.s32 %s61, 16
    %p76 = scmp.le.s32.totalorder %s75, 16
    // Predicated region
    $region22: #{tpu_custom_call.1} parent=1 // pred_check
      %p77 = pneg %p76
    $region23: #{tpu_custom_call.1} parent=1 // pred_check_branch
      %79 = sbr.rel (%p77) target = $region25
    $region24: #{tpu_custom_call.1} parent=1 // pred_region
      %v80 = vld [vmem:[#allocation2] sm:$0xff]
      %v81 = vadd.f32 %v73, %v74
      %v82 = vadd.f32 %v80, %v81
      %83 = vst [vmem:[#allocation2] sm:$0xff] %v82
    $region25: #{tpu_custom_call.1} parent=1 // pred_fallthru
      _
    %p84 = scmp.gt.s32.totalorder %s75, 16
    // Predicated region
    $region26: #{tpu_custom_call.1} parent=1 // pred_check
      %p85 = pneg %p84
    $region27: #{tpu_custom_call.1} parent=1 // pred_check_branch
      %87 = sbr.rel (%p85) target = $region29
    $region28: #{tpu_custom_call.1} parent=1 // pred_region
      %v88 = vlaneseq
      %v89 = vshrl.u32 %v88, 7
      %v90 = vadd.s32 %v89, 8
      %v91 = vstv %s61
      %v92 = vadd.s32 %v91, %v89
      %v93 = vadd.s32 %v91, %v90
      %vm94 = vcmp.lt.s32.totalorder %v92, 16
      %vm95 = vcmp.lt.s32.totalorder %v93, 16
      %v96 = vsel %vm94, %v73, 0.0
      %v97 = vsel %vm95, %v74, 0.0
      %v98 = vld [vmem:[#allocation2] sm:$0xff]
      %v99 = vadd.f32 %v96, %v97
      %v100 = vadd.f32 %v98, %v99
      %101 = vst [vmem:[#allocation2] sm:$0xff] %v100
    $region29: #{tpu_custom_call.1} parent=1 // pred_fallthru
      _
    // Predicated region
    $region30: #{tpu_custom_call.1} parent=1 // pred_check
      %p102 = pneg %p62
    $region31: #{tpu_custom_call.1} parent=1 // pred_check_branch
      %104 = sbr.rel (%p102) target = $region33
    $region32: #{tpu_custom_call.1} parent=1 // pred_region
      %v105 = vld [vmem:[#allocation2] sm:$0xff]
      %106 = vadd.xlane.f32.xlu0 %v105
      %v107 = vpop.xlane.xlu0 %106
      %v108 = vrot.slane %v107, 4
      %v109 = vadd.f32 %v107, %v108
      %v110 = vrot.slane %v109, 2
      %v111 = vadd.f32 %v109, %v110
      %v112 = vrot.slane %v111, 1
      %v113 = vadd.f32 %v111, %v112
      %s114 = vtos %v113
      %v115 = vstv %s114
      %v116 = vadd.f32 %v115, 0.0
      %117 = vst [vmem:[#allocation8] sm:$0xff] %v116
    $region33: #{tpu_custom_call.1} parent=1 // pred_fallthru
      _
    // Predicated region
    $region34: #{tpu_custom_call.1} parent=1 // pred_check
      _
    $region35: #{tpu_custom_call.1} parent=1 // pred_check_branch
      %119 = sbr.rel (0) target = $region37
    $region36: #{tpu_custom_call.1} parent=1 // pred_region
      %s121 = ssub.s32 128, 128
      %122 = vsyncadd [#allocation5], %s121
      %s124 = sshll.u32 [#allocation8], 4
      %s125 = int_to_ptr.vmem [resolvable:$true] %s124
      %127 = dma.vmem_to_hbm [thread:$0]  %s125, 128, %s2, [#allocation5]
    $region37: #{tpu_custom_call.1} parent=1 // pred_fallthru
      _
    // Predicated region
    $region38: #{tpu_custom_call.1} parent=1 // pred_check
      _
    $region39: #{tpu_custom_call.1} parent=1 // pred_check_branch
      %129 = sbr.rel (0) target = $region41
    $region40: #{tpu_custom_call.1} parent=1 // pred_region
      %130 = dma.done [#allocation5], 128
    $region41: #{tpu_custom_call.1} parent=1 // pred_fallthru
      _
    %131 = vsyncpa [#allocation4], 1
    %132 = vsyncpa [#allocation7], 1
    %133 = vsyncpa [#allocation5], 1

</llo_original>
